<compile_context>
chip_gen: v5e
topology: v5e:2x2
jax: 0.10.0
libtpu: 0.0.40
codegen_flags: <defaults>
</compile_context>

<pallas_src>
import functools

import jax
import jax.numpy as jnp
from jax import lax
from jax.experimental import pallas as pl
from jax.experimental.pallas import tpu as pltpu

GROUPS = 4      # nn.GroupNorm(4, dim_in)
EPS = 1e-5      # PyTorch GroupNorm default eps


def _dwconv_gn_pw_kernel(x_ref, w1b1_ref, w2b2_ref, masks_ref, mate_ref, o_ref,
                         *, H, W, groups, eps):
    """Nb batch images per grid step, spatial-minor layout.

    x_ref     : (Nb, C_in, H*W)     input (flattened NCHW, no padding)
    w1b1_ref  : (C_in, 10)          cols 0..8 = depthwise 3x3 taps (k = kh*3+kw), col 9 = b1
    w2b2_ref  : (C_out, C_in + 1)   cols 0..C_in-1 = w2*gamma (affine folded), last col = b2 + w2@beta
    masks_ref : (9, H*W)            f32 0/1 zero-padding masks per tap (precomputed)
    mate_ref  : (C_in, C_in)        f32 group-mate matrix for GroupNorm combine
    o_ref     : (Nb, C_out, H*W)
    """
    Nb, C_in, HW = x_ref.shape
    C_out = o_ref.shape[1]
    cpg = C_in // groups
    n_per_group = jnp.float32(cpg * HW)

    w1 = w1b1_ref[:, 0:9]                     # (C_in, 9)  per-channel taps
    b1 = w1b1_ref[:, 9:10]                    # (C_in, 1)
    w2 = w2b2_ref[:, 0:C_in]                  # (C_out, C_in)   gamma already folded in
    b2 = w2b2_ref[:, C_in:C_in + 1]           # (C_out, 1)      beta already folded in
    masks = masks_ref[...]                    # (9, HW)

    # ---- Phase 1: depthwise 3x3 + bias per image; gather per-channel (sum, sumsq) ----
    accs = []
    stats = []
    for i in range(Nb):
        x = x_ref[i].astype(jnp.float32)      # (C_in, HW), HW on lanes

        # Center tap: mask is all-true, skip the mask multiply entirely.
        acc = x * w1[:, 4:5]
        for k in range(9):
            if k == 4:
                continue
            dh, dw = k // 3 - 1, k % 3 - 1
            s = dh * W + dw                   # flat-index offset of this tap
            # shifted[p] = x[(p + s) % HW]; wrap positions are zeroed by the mask
            # (holds for a 3x3 / pad=1 kernel with H, W >= 2).
            shifted = pltpu.roll(x, (-s) % HW, axis=1)
            acc = acc + (shifted * w1[:, k:k + 1]) * masks[k:k + 1, :]
        acc = acc + b1                        # (C_in, HW)
        accs.append(acc)

        stats.append(jnp.sum(acc, axis=1, keepdims=True))        # per-channel sum
        stats.append(jnp.sum(acc * acc, axis=1, keepdims=True))   # per-channel sum of squares

    # ---- GroupNorm(4): ONE tiny group-combine matmul for all images & both moments ----
    stats_all = jnp.concatenate(stats, axis=1)                    # (C_in, 2*Nb)
    g = jnp.dot(mate_ref[...], stats_all,
                preferred_element_type=jnp.float32) / n_per_group  # (C_in, 2*Nb)

    # ---- Phase 2: normalize (affine folded into w2) + pointwise 1x1 conv per image ----
    for i in range(Nb):
        mean = g[:, 2 * i:2 * i + 1]                              # (C_in, 1)
        esq = g[:, 2 * i + 1:2 * i + 2]                           # (C_in, 1)
        var = esq - mean * mean                                   # one-pass variance
        inv = lax.rsqrt(var + eps)
        yn = (accs[i] - mean) * inv                               # (C_in, HW)

        out = jnp.dot(w2, yn, preferred_element_type=jnp.float32) + b2  # (C_out, HW)
        o_ref[i] = out.astype(o_ref.dtype)


def _pick_block_batch(N, max_nb=8):
    """Largest divisor of N that is <= max_nb.

    Amortizes the per-grid-step overhead over up to 8 images while keeping the
    grid exact (no ragged last block).  For N >= 32 this yields >= 4 grid steps,
    i.e. >= 2 pipelined steps per v7x TensorCore with 'parallel' semantics.
    """
    nb = min(N, max_nb)
    while N % nb:
        nb -= 1
    return nb


def depthwise_conv2d_block(x_nchw, w1, b1, gamma, beta, w2, b2):
    """x_nchw: (N, C_in, H, W); w1: (C_in, 1, 3, 3); w2: (C_out, C_in, 1, 1).

    Returns (N, C_out, H, W), matching the PyTorch module's NCHW output.
    """
    N, C_in, H, W = x_nchw.shape
    C_out = w2.shape[0]
    assert C_in % GROUPS == 0
    HW = H * W
    Nb = _pick_block_batch(N)

    # Free reshape only (no transpose / pad HBM passes).
    x_flat = x_nchw.reshape(N, C_in, HW)

    # Pack per-channel params: (w1 | b1) and (w2*gamma | b2 + w2@beta).
    w1b1 = jnp.concatenate([w1.reshape(C_in, 9), b1.reshape(C_in, 1)], axis=1)
    w2m = w2.reshape(C_out, C_in)
    w2f = w2m * gamma.reshape(1, C_in)                 # fold GN scale into 1x1 weight
    b2f = b2 + w2m @ beta                              # fold GN shift into 1x1 bias
    w2b2 = jnp.concatenate([w2f, b2f.reshape(C_out, 1)], axis=1)

    # Constant zero-padding masks per tap (hoisted out of the kernel body).
    pos = jnp.arange(HW, dtype=jnp.int32)
    row = pos // W
    col = pos % W
    mask_rows = []
    for k in range(9):
        dh, dw = k // 3 - 1, k % 3 - 1
        valid = (row + dh >= 0) & (row + dh < H) & (col + dw >= 0) & (col + dw < W)
        mask_rows.append(valid.astype(jnp.float32))
    masks = jnp.stack(mask_rows, axis=0)               # (9, HW)

    # Constant group-mate matrix for the GroupNorm combine.
    cpg = C_in // GROUPS
    ci = jnp.arange(C_in, dtype=jnp.int32)
    mate = ((ci[:, None] // cpg) == (ci[None, :] // cpg)).astype(jnp.float32)  # (C_in, C_in)

    kernel = functools.partial(_dwconv_gn_pw_kernel, H=H, W=W, groups=GROUPS, eps=EPS)

    out_flat = pl.pallas_call(
        kernel,
        out_shape=jax.ShapeDtypeStruct((N, C_out, HW), jnp.float32),
        grid_spec=pltpu.PrefetchScalarGridSpec(
            num_scalar_prefetch=0,
            grid=(N // Nb,),
            in_specs=[
                pl.BlockSpec((Nb, C_in, HW), lambda n: (n, 0, 0)),
                pl.BlockSpec((C_in, 10), lambda n: (0, 0)),
                pl.BlockSpec((C_out, C_in + 1), lambda n: (0, 0)),
                pl.BlockSpec((9, HW), lambda n: (0, 0)),
                pl.BlockSpec((C_in, C_in), lambda n: (0, 0)),
            ],
            out_specs=pl.BlockSpec((Nb, C_out, HW), lambda n: (n, 0, 0)),
        ),
        compiler_params=pltpu.CompilerParams(dimension_semantics=("parallel",)),
    )(x_flat, w1b1, w2b2, masks, mate)

    return out_flat.reshape(N, C_out, H, W)


def _ref_forward(x, w1, b1, gamma, beta, w2, b2):
    """Pure-JAX reference mirroring the PyTorch module (NCHW)."""
    y = lax.conv_general_dilated(
        x, w1, window_strides=(1, 1), padding=((1, 1), (1, 1)),
        dimension_numbers=('NCHW', 'OIHW', 'NCHW'),
        feature_group_count=x.shape[1])
    y = y + b1.reshape(1, -1, 1, 1)
    N, C, H, W = y.shape
    yg = y.reshape(N, GROUPS, -1)
    mean = yg.mean(-1, keepdims=True)
    var = ((yg - mean) ** 2).mean(-1, keepdims=True)
    yn = ((yg - mean) / jnp.sqrt(var + EPS)).reshape(N, C, H, W)
    yn = yn * gamma.reshape(1, C, 1, 1) + beta.reshape(1, C, 1, 1)
    out = lax.conv_general_dilated(
        yn, w2, window_strides=(1, 1), padding='VALID',
        dimension_numbers=('NCHW', 'OIHW', 'NCHW'))
    return out + b2.reshape(1, -1, 1, 1)


if __name__ == "__main__":
    key = jax.random.PRNGKey(0)
    N, C_in, H, W, C_out = 2, 8, 16, 16, 16
    ks = jax.random.split(key, 7)

    # Deterministic synthetic parameters (shapes follow nn.Conv2d / nn.GroupNorm).
    x = jax.random.normal(ks[0], (N, C_in, H, W), jnp.float32)
    w1 = jax.random.normal(ks[1], (C_in, 1, 3, 3), jnp.float32) * 0.1       # depthwise weight
    b1 = jax.random.normal(ks[2], (C_in,), jnp.float32) * 0.1
    gamma = 1.0 + jax.random.normal(ks[3], (C_in,), jnp.float32) * 0.1      # GroupNorm weight
    beta = jax.random.normal(ks[4], (C_in,), jnp.float32) * 0.1             # GroupNorm bias
    w2 = jax.random.normal(ks[5], (C_out, C_in, 1, 1), jnp.float32) * 0.1   # 1x1 conv weight
    b2 = jax.random.normal(ks[6], (C_out,), jnp.float32) * 0.1

    out = depthwise_conv2d_block(x, w1, b1, gamma, beta, w2, b2)
    out = jax.block_until_ready(out)

    ref = _ref_forward(x, w1, b1, gamma, beta, w2, b2)
    assert out.shape == (N, C_out, H, W), out.shape
    max_err = float(jnp.max(jnp.abs(out - ref)))
    assert jnp.allclose(out, ref, atol=1e-4, rtol=1e-4), f"max abs err {max_err}"

    print("KERNEL_OK")
</pallas_src>

<mosaic_0001>
module attributes {stable_mosaic.version = 11 : i64} {
  func.func @_dwconv_gn_pw_kernel(%arg0: i32, %arg1: memref<2x8x256xf32, #tpu.memory_space<vmem>>, %arg2: memref<8x10xf32, #tpu.memory_space<vmem>>, %arg3: memref<16x9xf32, #tpu.memory_space<vmem>>, %arg4: memref<9x256xf32, #tpu.memory_space<vmem>>, %arg5: memref<8x8xf32, #tpu.memory_space<vmem>>, %arg6: memref<2x16x256xf32, #tpu.memory_space<vmem>>) attributes {dimension_semantics = [#tpu.dimension_semantics<parallel>], iteration_bounds = array<i64: 1>, scalar_prefetch = 0 : i64, scratch_operands = 0 : i64, tpu.core_type = #tpu.core_type<tc>, window_params = [{transform_indices = @transform_0, window_bounds = array<i64: 2, 8, 256>}, {pipeline_mode = #tpu.pipeline_mode<synchronous>, transform_indices = @transform_1, window_bounds = array<i64: 8, 10>}, {pipeline_mode = #tpu.pipeline_mode<synchronous>, transform_indices = @transform_2, window_bounds = array<i64: 16, 9>}, {pipeline_mode = #tpu.pipeline_mode<synchronous>, transform_indices = @transform_3, window_bounds = array<i64: 9, 256>}, {pipeline_mode = #tpu.pipeline_mode<synchronous>, transform_indices = @transform_4, window_bounds = array<i64: 8, 8>}, {transform_indices = @transform_5, window_bounds = array<i64: 2, 16, 256>}]} {
    %c0 = arith.constant 0 : index
    %c0_0 = arith.constant 0 : index
    %0 = vector.load %arg2[%c0, %c0_0] : memref<8x10xf32, #tpu.memory_space<vmem>>, vector<8x9xf32>
    %c0_1 = arith.constant 0 : index
    %c9 = arith.constant 9 : index
    %1 = vector.load %arg2[%c0_1, %c9] : memref<8x10xf32, #tpu.memory_space<vmem>>, vector<8x1xf32>
    %c0_2 = arith.constant 0 : index
    %c0_3 = arith.constant 0 : index
    %2 = vector.load %arg3[%c0_2, %c0_3] : memref<16x9xf32, #tpu.memory_space<vmem>>, vector<16x8xf32>
    %c0_4 = arith.constant 0 : index
    %c8 = arith.constant 8 : index
    %3 = vector.load %arg3[%c0_4, %c8] : memref<16x9xf32, #tpu.memory_space<vmem>>, vector<16x1xf32>
    %c0_5 = arith.constant 0 : index
    %c0_6 = arith.constant 0 : index
    %4 = vector.load %arg4[%c0_5, %c0_6] : memref<9x256xf32, #tpu.memory_space<vmem>>, vector<9x256xf32>
    %c0_7 = arith.constant 0 : index
    %c0_8 = arith.constant 0 : index
    %c0_9 = arith.constant 0 : index
    %5 = vector.load %arg1[%c0_7, %c0_8, %c0_9] : memref<2x8x256xf32, #tpu.memory_space<vmem>>, vector<1x8x256xf32>
    %6 = vector.shape_cast %5 : vector<1x8x256xf32> to vector<8x256xf32>
    %7 = vector.extract_strided_slice %0 {offsets = [0, 4], sizes = [8, 1], strides = [1, 1]} : vector<8x9xf32> to vector<8x1xf32>
    %8 = vector.broadcast %7 : vector<8x1xf32> to vector<8x256xf32>
    %9 = arith.mulf %6, %8 : vector<8x256xf32>
    %c17_i32 = arith.constant 17 : i32
    %10 = tpu.dynamic_rotate %6 by %c17_i32 dim 1 : vector<8x256xf32>, i32 -> vector<8x256xf32>
    %11 = vector.extract_strided_slice %0 {offsets = [0, 0], sizes = [8, 1], strides = [1, 1]} : vector<8x9xf32> to vector<8x1xf32>
    %12 = vector.broadcast %11 : vector<8x1xf32> to vector<8x256xf32>
    %13 = arith.mulf %10, %12 : vector<8x256xf32>
    %14 = vector.extract_strided_slice %4 {offsets = [0, 0], sizes = [1, 256], strides = [1, 1]} : vector<9x256xf32> to vector<1x256xf32>
    %15 = vector.broadcast %14 : vector<1x256xf32> to vector<8x256xf32>
    %16 = arith.mulf %13, %15 : vector<8x256xf32>
    %17 = arith.addf %9, %16 : vector<8x256xf32>
    %c16_i32 = arith.constant 16 : i32
    %18 = tpu.dynamic_rotate %6 by %c16_i32 dim 1 : vector<8x256xf32>, i32 -> vector<8x256xf32>
    %19 = vector.extract_strided_slice %0 {offsets = [0, 1], sizes = [8, 1], strides = [1, 1]} : vector<8x9xf32> to vector<8x1xf32>
    %20 = vector.broadcast %19 : vector<8x1xf32> to vector<8x256xf32>
    %21 = arith.mulf %18, %20 : vector<8x256xf32>
    %22 = vector.extract_strided_slice %4 {offsets = [1, 0], sizes = [1, 256], strides = [1, 1]} : vector<9x256xf32> to vector<1x256xf32>
    %23 = vector.broadcast %22 : vector<1x256xf32> to vector<8x256xf32>
    %24 = arith.mulf %21, %23 : vector<8x256xf32>
    %25 = arith.addf %17, %24 : vector<8x256xf32>
    %c15_i32 = arith.constant 15 : i32
    %26 = tpu.dynamic_rotate %6 by %c15_i32 dim 1 : vector<8x256xf32>, i32 -> vector<8x256xf32>
    %27 = vector.extract_strided_slice %0 {offsets = [0, 2], sizes = [8, 1], strides = [1, 1]} : vector<8x9xf32> to vector<8x1xf32>
    %28 = vector.broadcast %27 : vector<8x1xf32> to vector<8x256xf32>
    %29 = arith.mulf %26, %28 : vector<8x256xf32>
    %30 = vector.extract_strided_slice %4 {offsets = [2, 0], sizes = [1, 256], strides = [1, 1]} : vector<9x256xf32> to vector<1x256xf32>
    %31 = vector.broadcast %30 : vector<1x256xf32> to vector<8x256xf32>
    %32 = arith.mulf %29, %31 : vector<8x256xf32>
    %33 = arith.addf %25, %32 : vector<8x256xf32>
    %c1_i32 = arith.constant 1 : i32
    %34 = tpu.dynamic_rotate %6 by %c1_i32 dim 1 : vector<8x256xf32>, i32 -> vector<8x256xf32>
    %35 = vector.extract_strided_slice %0 {offsets = [0, 3], sizes = [8, 1], strides = [1, 1]} : vector<8x9xf32> to vector<8x1xf32>
    %36 = vector.broadcast %35 : vector<8x1xf32> to vector<8x256xf32>
    %37 = arith.mulf %34, %36 : vector<8x256xf32>
    %38 = vector.extract_strided_slice %4 {offsets = [3, 0], sizes = [1, 256], strides = [1, 1]} : vector<9x256xf32> to vector<1x256xf32>
    %39 = vector.broadcast %38 : vector<1x256xf32> to vector<8x256xf32>
    %40 = arith.mulf %37, %39 : vector<8x256xf32>
    %41 = arith.addf %33, %40 : vector<8x256xf32>
    %c255_i32 = arith.constant 255 : i32
    %42 = tpu.dynamic_rotate %6 by %c255_i32 dim 1 : vector<8x256xf32>, i32 -> vector<8x256xf32>
    %43 = vector.extract_strided_slice %0 {offsets = [0, 5], sizes = [8, 1], strides = [1, 1]} : vector<8x9xf32> to vector<8x1xf32>
    %44 = vector.broadcast %43 : vector<8x1xf32> to vector<8x256xf32>
    %45 = arith.mulf %42, %44 : vector<8x256xf32>
    %46 = vector.extract_strided_slice %4 {offsets = [5, 0], sizes = [1, 256], strides = [1, 1]} : vector<9x256xf32> to vector<1x256xf32>
    %47 = vector.broadcast %46 : vector<1x256xf32> to vector<8x256xf32>
    %48 = arith.mulf %45, %47 : vector<8x256xf32>
    %49 = arith.addf %41, %48 : vector<8x256xf32>
    %c241_i32 = arith.constant 241 : i32
    %50 = tpu.dynamic_rotate %6 by %c241_i32 dim 1 : vector<8x256xf32>, i32 -> vector<8x256xf32>
    %51 = vector.extract_strided_slice %0 {offsets = [0, 6], sizes = [8, 1], strides = [1, 1]} : vector<8x9xf32> to vector<8x1xf32>
    %52 = vector.broadcast %51 : vector<8x1xf32> to vector<8x256xf32>
    %53 = arith.mulf %50, %52 : vector<8x256xf32>
    %54 = vector.extract_strided_slice %4 {offsets = [6, 0], sizes = [1, 256], strides = [1, 1]} : vector<9x256xf32> to vector<1x256xf32>
    %55 = vector.broadcast %54 : vector<1x256xf32> to vector<8x256xf32>
    %56 = arith.mulf %53, %55 : vector<8x256xf32>
    %57 = arith.addf %49, %56 : vector<8x256xf32>
    %c240_i32 = arith.constant 240 : i32
    %58 = tpu.dynamic_rotate %6 by %c240_i32 dim 1 : vector<8x256xf32>, i32 -> vector<8x256xf32>
    %59 = vector.extract_strided_slice %0 {offsets = [0, 7], sizes = [8, 1], strides = [1, 1]} : vector<8x9xf32> to vector<8x1xf32>
    %60 = vector.broadcast %59 : vector<8x1xf32> to vector<8x256xf32>
    %61 = arith.mulf %58, %60 : vector<8x256xf32>
    %62 = vector.extract_strided_slice %4 {offsets = [7, 0], sizes = [1, 256], strides = [1, 1]} : vector<9x256xf32> to vector<1x256xf32>
    %63 = vector.broadcast %62 : vector<1x256xf32> to vector<8x256xf32>
    %64 = arith.mulf %61, %63 : vector<8x256xf32>
    %65 = arith.addf %57, %64 : vector<8x256xf32>
    %c239_i32 = arith.constant 239 : i32
    %66 = tpu.dynamic_rotate %6 by %c239_i32 dim 1 : vector<8x256xf32>, i32 -> vector<8x256xf32>
    %67 = vector.extract_strided_slice %0 {offsets = [0, 8], sizes = [8, 1], strides = [1, 1]} : vector<8x9xf32> to vector<8x1xf32>
    %68 = vector.broadcast %67 : vector<8x1xf32> to vector<8x256xf32>
    %69 = arith.mulf %66, %68 : vector<8x256xf32>
    %70 = vector.extract_strided_slice %4 {offsets = [8, 0], sizes = [1, 256], strides = [1, 1]} : vector<9x256xf32> to vector<1x256xf32>
    %71 = vector.broadcast %70 : vector<1x256xf32> to vector<8x256xf32>
    %72 = arith.mulf %69, %71 : vector<8x256xf32>
    %73 = arith.addf %65, %72 : vector<8x256xf32>
    %74 = vector.broadcast %1 : vector<8x1xf32> to vector<8x256xf32>
    %75 = arith.addf %73, %74 : vector<8x256xf32>
    %cst = arith.constant dense<0.000000e+00> : vector<8xf32>
    %76 = vector.multi_reduction <add>, %75, %cst [1] : vector<8x256xf32> to vector<8xf32>
    %77 = vector.shape_cast %76 : vector<8xf32> to vector<8x1xf32>
    %78 = arith.mulf %75, %75 : vector<8x256xf32>
    %cst_10 = arith.constant dense<0.000000e+00> : vector<8xf32>
    %79 = vector.multi_reduction <add>, %78, %cst_10 [1] : vector<8x256xf32> to vector<8xf32>
    %80 = vector.shape_cast %79 : vector<8xf32> to vector<8x1xf32>
    %c1 = arith.constant 1 : index
    %c0_11 = arith.constant 0 : index
    %c0_12 = arith.constant 0 : index
    %81 = vector.load %arg1[%c1, %c0_11, %c0_12] : memref<2x8x256xf32, #tpu.memory_space<vmem>>, vector<1x8x256xf32>
    %82 = vector.shape_cast %81 : vector<1x8x256xf32> to vector<8x256xf32>
    %83 = vector.extract_strided_slice %0 {offsets = [0, 4], sizes = [8, 1], strides = [1, 1]} : vector<8x9xf32> to vector<8x1xf32>
    %84 = vector.broadcast %83 : vector<8x1xf32> to vector<8x256xf32>
    %85 = arith.mulf %82, %84 : vector<8x256xf32>
    %c17_i32_13 = arith.constant 17 : i32
    %86 = tpu.dynamic_rotate %82 by %c17_i32_13 dim 1 : vector<8x256xf32>, i32 -> vector<8x256xf32>
    %87 = vector.extract_strided_slice %0 {offsets = [0, 0], sizes = [8, 1], strides = [1, 1]} : vector<8x9xf32> to vector<8x1xf32>
    %88 = vector.broadcast %87 : vector<8x1xf32> to vector<8x256xf32>
    %89 = arith.mulf %86, %88 : vector<8x256xf32>
    %90 = vector.extract_strided_slice %4 {offsets = [0, 0], sizes = [1, 256], strides = [1, 1]} : vector<9x256xf32> to vector<1x256xf32>
    %91 = vector.broadcast %90 : vector<1x256xf32> to vector<8x256xf32>
    %92 = arith.mulf %89, %91 : vector<8x256xf32>
    %93 = arith.addf %85, %92 : vector<8x256xf32>
    %c16_i32_14 = arith.constant 16 : i32
    %94 = tpu.dynamic_rotate %82 by %c16_i32_14 dim 1 : vector<8x256xf32>, i32 -> vector<8x256xf32>
    %95 = vector.extract_strided_slice %0 {offsets = [0, 1], sizes = [8, 1], strides = [1, 1]} : vector<8x9xf32> to vector<8x1xf32>
    %96 = vector.broadcast %95 : vector<8x1xf32> to vector<8x256xf32>
    %97 = arith.mulf %94, %96 : vector<8x256xf32>
    %98 = vector.extract_strided_slice %4 {offsets = [1, 0], sizes = [1, 256], strides = [1, 1]} : vector<9x256xf32> to vector<1x256xf32>
    %99 = vector.broadcast %98 : vector<1x256xf32> to vector<8x256xf32>
    %100 = arith.mulf %97, %99 : vector<8x256xf32>
    %101 = arith.addf %93, %100 : vector<8x256xf32>
    %c15_i32_15 = arith.constant 15 : i32
    %102 = tpu.dynamic_rotate %82 by %c15_i32_15 dim 1 : vector<8x256xf32>, i32 -> vector<8x256xf32>
    %103 = vector.extract_strided_slice %0 {offsets = [0, 2], sizes = [8, 1], strides = [1, 1]} : vector<8x9xf32> to vector<8x1xf32>
    %104 = vector.broadcast %103 : vector<8x1xf32> to vector<8x256xf32>
    %105 = arith.mulf %102, %104 : vector<8x256xf32>
    %106 = vector.extract_strided_slice %4 {offsets = [2, 0], sizes = [1, 256], strides = [1, 1]} : vector<9x256xf32> to vector<1x256xf32>
    %107 = vector.broadcast %106 : vector<1x256xf32> to vector<8x256xf32>
    %108 = arith.mulf %105, %107 : vector<8x256xf32>
    %109 = arith.addf %101, %108 : vector<8x256xf32>
    %c1_i32_16 = arith.constant 1 : i32
    %110 = tpu.dynamic_rotate %82 by %c1_i32_16 dim 1 : vector<8x256xf32>, i32 -> vector<8x256xf32>
    %111 = vector.extract_strided_slice %0 {offsets = [0, 3], sizes = [8, 1], strides = [1, 1]} : vector<8x9xf32> to vector<8x1xf32>
    %112 = vector.broadcast %111 : vector<8x1xf32> to vector<8x256xf32>
    %113 = arith.mulf %110, %112 : vector<8x256xf32>
    %114 = vector.extract_strided_slice %4 {offsets = [3, 0], sizes = [1, 256], strides = [1, 1]} : vector<9x256xf32> to vector<1x256xf32>
    %115 = vector.broadcast %114 : vector<1x256xf32> to vector<8x256xf32>
    %116 = arith.mulf %113, %115 : vector<8x256xf32>
    %117 = arith.addf %109, %116 : vector<8x256xf32>
    %c255_i32_17 = arith.constant 255 : i32
    %118 = tpu.dynamic_rotate %82 by %c255_i32_17 dim 1 : vector<8x256xf32>, i32 -> vector<8x256xf32>
    %119 = vector.extract_strided_slice %0 {offsets = [0, 5], sizes = [8, 1], strides = [1, 1]} : vector<8x9xf32> to vector<8x1xf32>
    %120 = vector.broadcast %119 : vector<8x1xf32> to vector<8x256xf32>
    %121 = arith.mulf %118, %120 : vector<8x256xf32>
    %122 = vector.extract_strided_slice %4 {offsets = [5, 0], sizes = [1, 256], strides = [1, 1]} : vector<9x256xf32> to vector<1x256xf32>
    %123 = vector.broadcast %122 : vector<1x256xf32> to vector<8x256xf32>
    %124 = arith.mulf %121, %123 : vector<8x256xf32>
    %125 = arith.addf %117, %124 : vector<8x256xf32>
    %c241_i32_18 = arith.constant 241 : i32
    %126 = tpu.dynamic_rotate %82 by %c241_i32_18 dim 1 : vector<8x256xf32>, i32 -> vector<8x256xf32>
    %127 = vector.extract_strided_slice %0 {offsets = [0, 6], sizes = [8, 1], strides = [1, 1]} : vector<8x9xf32> to vector<8x1xf32>
    %128 = vector.broadcast %127 : vector<8x1xf32> to vector<8x256xf32>
    %129 = arith.mulf %126, %128 : vector<8x256xf32>
    %130 = vector.extract_strided_slice %4 {offsets = [6, 0], sizes = [1, 256], strides = [1, 1]} : vector<9x256xf32> to vector<1x256xf32>
    %131 = vector.broadcast %130 : vector<1x256xf32> to vector<8x256xf32>
    %132 = arith.mulf %129, %131 : vector<8x256xf32>
    %133 = arith.addf %125, %132 : vector<8x256xf32>
    %c240_i32_19 = arith.constant 240 : i32
    %134 = tpu.dynamic_rotate %82 by %c240_i32_19 dim 1 : vector<8x256xf32>, i32 -> vector<8x256xf32>
    %135 = vector.extract_strided_slice %0 {offsets = [0, 7], sizes = [8, 1], strides = [1, 1]} : vector<8x9xf32> to vector<8x1xf32>
    %136 = vector.broadcast %135 : vector<8x1xf32> to vector<8x256xf32>
    %137 = arith.mulf %134, %136 : vector<8x256xf32>
    %138 = vector.extract_strided_slice %4 {offsets = [7, 0], sizes = [1, 256], strides = [1, 1]} : vector<9x256xf32> to vector<1x256xf32>
    %139 = vector.broadcast %138 : vector<1x256xf32> to vector<8x256xf32>
    %140 = arith.mulf %137, %139 : vector<8x256xf32>
    %141 = arith.addf %133, %140 : vector<8x256xf32>
    %c239_i32_20 = arith.constant 239 : i32
    %142 = tpu.dynamic_rotate %82 by %c239_i32_20 dim 1 : vector<8x256xf32>, i32 -> vector<8x256xf32>
    %143 = vector.extract_strided_slice %0 {offsets = [0, 8], sizes = [8, 1], strides = [1, 1]} : vector<8x9xf32> to vector<8x1xf32>
    %144 = vector.broadcast %143 : vector<8x1xf32> to vector<8x256xf32>
    %145 = arith.mulf %142, %144 : vector<8x256xf32>
    %146 = vector.extract_strided_slice %4 {offsets = [8, 0], sizes = [1, 256], strides = [1, 1]} : vector<9x256xf32> to vector<1x256xf32>
    %147 = vector.broadcast %146 : vector<1x256xf32> to vector<8x256xf32>
    %148 = arith.mulf %145, %147 : vector<8x256xf32>
    %149 = arith.addf %141, %148 : vector<8x256xf32>
    %150 = vector.broadcast %1 : vector<8x1xf32> to vector<8x256xf32>
    %151 = arith.addf %149, %150 : vector<8x256xf32>
    %cst_21 = arith.constant dense<0.000000e+00> : vector<8xf32>
    %152 = vector.multi_reduction <add>, %151, %cst_21 [1] : vector<8x256xf32> to vector<8xf32>
    %153 = vector.shape_cast %152 : vector<8xf32> to vector<8x1xf32>
    %154 = arith.mulf %151, %151 : vector<8x256xf32>
    %cst_22 = arith.constant dense<0.000000e+00> : vector<8xf32>
    %155 = vector.multi_reduction <add>, %154, %cst_22 [1] : vector<8x256xf32> to vector<8xf32>
    %156 = vector.shape_cast %155 : vector<8xf32> to vector<8x1xf32>
    %157 = tpu.concatenate %77, %80, %153, %156 in 1 : vector<8x1xf32>, vector<8x1xf32>, vector<8x1xf32>, vector<8x1xf32> -> vector<8x4xf32>
    %c0_23 = arith.constant 0 : index
    %c0_24 = arith.constant 0 : index
    %158 = vector.load %arg5[%c0_23, %c0_24] : memref<8x8xf32, #tpu.memory_space<vmem>>, vector<8x8xf32>
    %cst_25 = arith.constant dense<0.000000e+00> : vector<8x4xf32>
    %159 = tpu.matmul %158, %157, %cst_25 {dimension_numbers = #tpu.dot_dimension_numbers<[1], [0], [0], [1], [0, 0, 1, 1], [], []>} : vector<8x8xf32>, vector<8x4xf32>, vector<8x4xf32> -> vector<8x4xf32>
    %cst_26 = arith.constant 5.120000e+02 : f32
    %160 = vector.broadcast %cst_26 : f32 to vector<8x4xf32>
    %161 = arith.divf %159, %160 : vector<8x4xf32>
    %162 = vector.extract_strided_slice %161 {offsets = [0, 0], sizes = [8, 1], strides = [1, 1]} : vector<8x4xf32> to vector<8x1xf32>
    %163 = vector.extract_strided_slice %161 {offsets = [0, 1], sizes = [8, 1], strides = [1, 1]} : vector<8x4xf32> to vector<8x1xf32>
    %164 = arith.mulf %162, %162 : vector<8x1xf32>
    %165 = arith.subf %163, %164 : vector<8x1xf32>
    %cst_27 = arith.constant 9.99999974E-6 : f32
    %166 = vector.broadcast %cst_27 : f32 to vector<8x1xf32>
    %167 = arith.addf %165, %166 : vector<8x1xf32>
    %168 = math.rsqrt %167 : vector<8x1xf32>
    %169 = vector.broadcast %162 : vector<8x1xf32> to vector<8x256xf32>
    %170 = arith.subf %75, %169 : vector<8x256xf32>
    %171 = vector.broadcast %168 : vector<8x1xf32> to vector<8x256xf32>
    %172 = arith.mulf %170, %171 : vector<8x256xf32>
    %cst_28 = arith.constant dense<0.000000e+00> : vector<16x256xf32>
    %173 = tpu.matmul %2, %172, %cst_28 {dimension_numbers = #tpu.dot_dimension_numbers<[1], [0], [0], [1], [0, 0, 1, 1], [], []>} : vector<16x8xf32>, vector<8x256xf32>, vector<16x256xf32> -> vector<16x256xf32>
    %174 = vector.broadcast %3 : vector<16x1xf32> to vector<16x256xf32>
    %175 = arith.addf %173, %174 : vector<16x256xf32>
    %c0_29 = arith.constant 0 : index
    %c0_30 = arith.constant 0 : index
    %c0_31 = arith.constant 0 : index
    %176 = vector.load %arg6[%c0_29, %c0_30, %c0_31] : memref<2x16x256xf32, #tpu.memory_space<vmem>>, vector<1x16x256xf32>
    %177 = vector.shape_cast %176 : vector<1x16x256xf32> to vector<16x256xf32>
    %178 = vector.shape_cast %175 : vector<16x256xf32> to vector<1x16x256xf32>
    tpu.vector_store %arg6[%c0_29, %c0_30, %c0_31], %178 {strides = array<i32>} : memref<2x16x256xf32, #tpu.memory_space<vmem>>, vector<1x16x256xf32>,
    %179 = vector.extract_strided_slice %161 {offsets = [0, 2], sizes = [8, 1], strides = [1, 1]} : vector<8x4xf32> to vector<8x1xf32>
    %180 = vector.extract_strided_slice %161 {offsets = [0, 3], sizes = [8, 1], strides = [1, 1]} : vector<8x4xf32> to vector<8x1xf32>
    %181 = arith.mulf %179, %179 : vector<8x1xf32>
    %182 = arith.subf %180, %181 : vector<8x1xf32>
    %cst_32 = arith.constant 9.99999974E-6 : f32
    %183 = vector.broadcast %cst_32 : f32 to vector<8x1xf32>
    %184 = arith.addf %182, %183 : vector<8x1xf32>
    %185 = math.rsqrt %184 : vector<8x1xf32>
    %186 = vector.broadcast %179 : vector<8x1xf32> to vector<8x256xf32>
    %187 = arith.subf %151, %186 : vector<8x256xf32>
    %188 = vector.broadcast %185 : vector<8x1xf32> to vector<8x256xf32>
    %189 = arith.mulf %187, %188 : vector<8x256xf32>
    %cst_33 = arith.constant dense<0.000000e+00> : vector<16x256xf32>
    %190 = tpu.matmul %2, %189, %cst_33 {dimension_numbers = #tpu.dot_dimension_numbers<[1], [0], [0], [1], [0, 0, 1, 1], [], []>} : vector<16x8xf32>, vector<8x256xf32>, vector<16x256xf32> -> vector<16x256xf32>
    %191 = vector.broadcast %3 : vector<16x1xf32> to vector<16x256xf32>
    %192 = arith.addf %190, %191 : vector<16x256xf32>
    %c1_34 = arith.constant 1 : index
    %c0_35 = arith.constant 0 : index
    %c0_36 = arith.constant 0 : index
    %193 = vector.load %arg6[%c1_34, %c0_35, %c0_36] : memref<2x16x256xf32, #tpu.memory_space<vmem>>, vector<1x16x256xf32>
    %194 = vector.shape_cast %193 : vector<1x16x256xf32> to vector<16x256xf32>
    %195 = vector.shape_cast %192 : vector<16x256xf32> to vector<1x16x256xf32>
    tpu.vector_store %arg6[%c1_34, %c0_35, %c0_36], %195 {strides = array<i32>} : memref<2x16x256xf32, #tpu.memory_space<vmem>>, vector<1x16x256xf32>,
    return
  }
  func.func @transform_0(%arg0: i32) -> (i32, i32, i32) {
    %c0_i32 = arith.constant 0 : i32
    %c0_i32_0 = arith.constant 0 : i32
    %c0_i32_1 = arith.constant 0 : i32
    return %arg0, %c0_i32, %c0_i32_0 : i32, i32, i32
  }
  func.func @transform_1(%arg0: i32) -> (i32, i32) {
    %c0_i32 = arith.constant 0 : i32
    %c0_i32_0 = arith.constant 0 : i32
    %c0_i32_1 = arith.constant 0 : i32
    return %c0_i32, %c0_i32_0 : i32, i32
  }
  func.func @transform_2(%arg0: i32) -> (i32, i32) {
    %c0_i32 = arith.constant 0 : i32
    %c0_i32_0 = arith.constant 0 : i32
    %c0_i32_1 = arith.constant 0 : i32
    return %c0_i32, %c0_i32_0 : i32, i32
  }
  func.func @transform_3(%arg0: i32) -> (i32, i32) {
    %c0_i32 = arith.constant 0 : i32
    %c0_i32_0 = arith.constant 0 : i32
    %c0_i32_1 = arith.constant 0 : i32
    return %c0_i32, %c0_i32_0 : i32, i32
  }
  func.func @transform_4(%arg0: i32) -> (i32, i32) {
    %c0_i32 = arith.constant 0 : i32
    %c0_i32_0 = arith.constant 0 : i32
    %c0_i32_1 = arith.constant 0 : i32
    return %c0_i32, %c0_i32_0 : i32, i32
  }
  func.func @transform_5(%arg0: i32) -> (i32, i32, i32) {
    %c0_i32 = arith.constant 0 : i32
    %c0_i32_0 = arith.constant 0 : i32
    %c0_i32_1 = arith.constant 0 : i32
    return %arg0, %c0_i32, %c0_i32_0 : i32, i32, i32
  }
}

</mosaic_0001>

<llo_original>
// kernel: tpu_custom_call.1
$region0: #{tpu_custom_call.1}
  #allocation0 [shape = 'u32[]', space=smem, size = 0x4, offset = 0x4, fixed_abs, tag = 'smem constant byte address 0x4 - core index']
  #allocation1 [shape = 'u32[72,128]{1,0:T(1,128)}', space=vmem, size = 0x9000, scoped, tag = 'internal scratch']
  %s0 = inlined_call_operand.hbm [shape: f32[2,8,256], index: 0, kind: input, shape index: {}]
  %s1 = inlined_call_operand.hbm [shape: f32[8,10], index: 1, kind: input, shape index: {}]
  %s2 = inlined_call_operand.hbm [shape: f32[16,9], index: 2, kind: input, shape index: {}]
  %s3 = inlined_call_operand.hbm [shape: f32[9,256], index: 3, kind: input, shape index: {}]
  %s4 = inlined_call_operand.hbm [shape: f32[8,8], index: 4, kind: input, shape index: {}]
  %s5 = inlined_call_operand.hbm [shape: f32[2,16,256], index: 5, kind: output, shape index: {}]
  %s6 = sld [smem:[#allocation0]]
  $region50: #{tpu_custom_call.1} parent=0
    _
  %s8 = ssub.s32 1, %s6
  %s9 = scalar_select 0, %s8, %s6
  $region1: #{tpu_custom_call.1} parent=0
    #allocation2 [shape = 'u8[16384]{0}', space=vmem, size = 0x4000, scoped, tag = 'input window, operand 0, single buffered']
    #allocation3 [shape = 's32[1]{0}', space=sflag, size = 0x4, scoped, tag = 'scoped memory for tpu_custom_call.1']
    #allocation4 [shape = 's32[1]{0}', space=sflag, size = 0x4, scoped, tag = 'scoped memory for tpu_custom_call.1']
    #allocation5 [shape = 'u8[4096]{0}', space=vmem, size = 0x1000, scoped, tag = 'input window, operand 1, single buffered']
    #allocation6 [shape = 's32[1]{0}', space=sflag, size = 0x4, scoped, tag = 'scoped memory for tpu_custom_call.1']
    #allocation7 [shape = 'u8[8192]{0}', space=vmem, size = 0x2000, scoped, tag = 'input window, operand 2, single buffered']
    #allocation8 [shape = 'u8[16384]{0}', space=vmem, size = 0x4000, scoped, tag = 'input window, operand 3, single buffered']
    #allocation9 [shape = 's32[1]{0}', space=sflag, size = 0x4, scoped, tag = 'scoped memory for tpu_custom_call.1']
    #allocation10 [shape = 'u8[4096]{0}', space=vmem, size = 0x1000, scoped, tag = 'input window, operand 4, single buffered']
    #allocation11 [shape = 'u8[32768]{0}', space=vmem, size = 0x8000, scoped, tag = 'output window, operand 0, single buffered']
    %10 = vsyncpa [#allocation3], 0
    %11 = vsyncpa [#allocation6], 0
    %12 = vsyncpa [#allocation9], 0
    %13 = vsyncpa [#allocation4], 0
    // Predicated region
    $region2: #{tpu_custom_call.1} parent=1 // pred_check
      _
    $region3: #{tpu_custom_call.1} parent=1 // pred_check_branch
      %15 = sbr.rel (0) target = $region5
    $region4: #{tpu_custom_call.1} parent=1 // pred_region
      %17 = vsyncadd [#allocation3], 0
      %s18 = sshll.u32 %s0, 4
      %s19 = int_to_ptr.hbm [resolvable:$true] %s18
      %s20 = sshll.u32 [#allocation2], 4
      %s21 = int_to_ptr.vmem [resolvable:$true] %s20
      %26 = dma.hbm_to_vmem [thread:$0]  %s19, 512, %s21, [#allocation3], 256, 256, 16
    $region5: #{tpu_custom_call.1} parent=1 // pred_fallthru
      _
    // Predicated region
    $region6: #{tpu_custom_call.1} parent=1 // pred_check
      _
    $region7: #{tpu_custom_call.1} parent=1 // pred_check_branch
      %28 = sbr.rel (0) target = $region9
    $region8: #{tpu_custom_call.1} parent=1 // pred_region
      %30 = vsyncadd [#allocation6], 0
      %s32 = sshll.u32 %s1, 4
      %s33 = int_to_ptr.hbm [resolvable:$true] %s32
      %s34 = sshll.u32 [#allocation5], 4
      %s35 = int_to_ptr.vmem [resolvable:$true] %s34
      %37 = dma.hbm_to_vmem [thread:$0]  %s33, 128, %s35, [#allocation6]
    $region9: #{tpu_custom_call.1} parent=1 // pred_fallthru
      _
    // Predicated region
    $region10: #{tpu_custom_call.1} parent=1 // pred_check
      _
    $region11: #{tpu_custom_call.1} parent=1 // pred_check_branch
      %39 = sbr.rel (0) target = $region13
    $region12: #{tpu_custom_call.1} parent=1 // pred_region
      %41 = vsyncadd [#allocation6], 0
      %s42 = sshll.u32 %s2, 4
      %s43 = int_to_ptr.hbm [resolvable:$true] %s42
      %s44 = sshll.u32 [#allocation7], 4
      %s45 = int_to_ptr.vmem [resolvable:$true] %s44
      %50 = dma.hbm_to_vmem [thread:$0]  %s43, 256, %s45, [#allocation6], 128, 128, 8
    $region13: #{tpu_custom_call.1} parent=1 // pred_fallthru
      _
    // Predicated region
    $region14: #{tpu_custom_call.1} parent=1 // pred_check
      _
    $region15: #{tpu_custom_call.1} parent=1 // pred_check_branch
      %52 = sbr.rel (0) target = $region17
    $region16: #{tpu_custom_call.1} parent=1 // pred_region
      %54 = vsyncadd [#allocation9], 0
      %s55 = sshll.u32 %s3, 4
      %s56 = int_to_ptr.hbm [resolvable:$true] %s55
      %s57 = sshll.u32 [#allocation8], 4
      %s58 = int_to_ptr.vmem [resolvable:$true] %s57
      %63 = dma.hbm_to_vmem [thread:$0]  %s56, 512, %s58, [#allocation9], 256, 256, 16
    $region17: #{tpu_custom_call.1} parent=1 // pred_fallthru
      _
    // Predicated region
    $region18: #{tpu_custom_call.1} parent=1 // pred_check
      _
    $region19: #{tpu_custom_call.1} parent=1 // pred_check_branch
      %65 = sbr.rel (0) target = $region21
    $region20: #{tpu_custom_call.1} parent=1 // pred_region
      %67 = vsyncadd [#allocation9], 0
      %s69 = sshll.u32 %s4, 4
      %s70 = int_to_ptr.hbm [resolvable:$true] %s69
      %s71 = sshll.u32 [#allocation10], 4
      %s72 = int_to_ptr.vmem [resolvable:$true] %s71
      %74 = dma.hbm_to_vmem [thread:$0]  %s70, 128, %s72, [#allocation9]
    $region21: #{tpu_custom_call.1} parent=1 // pred_fallthru
      _
    // Predicated region
    $region22: #{tpu_custom_call.1} parent=1 // pred_check
      _
    $region23: #{tpu_custom_call.1} parent=1 // pred_check_branch
      %76 = sbr.rel (0) target = $region25
    $region24: #{tpu_custom_call.1} parent=1 // pred_region
      %78 = dma.done [#allocation3], 512
    $region25: #{tpu_custom_call.1} parent=1 // pred_fallthru
      _
    // Predicated region
    $region26: #{tpu_custom_call.1} parent=1 // pred_check
      _
    $region27: #{tpu_custom_call.1} parent=1 // pred_check_branch
      %80 = sbr.rel (0) target = $region29
    $region28: #{tpu_custom_call.1} parent=1 // pred_region
      %82 = dma.done [#allocation6], 128
    $region29: #{tpu_custom_call.1} parent=1 // pred_fallthru
      _
    // Predicated region
    $region30: #{tpu_custom_call.1} parent=1 // pred_check
      _
    $region31: #{tpu_custom_call.1} parent=1 // pred_check_branch
      %84 = sbr.rel (0) target = $region33
    $region32: #{tpu_custom_call.1} parent=1 // pred_region
      %86 = dma.done [#allocation6], 256
    $region33: #{tpu_custom_call.1} parent=1 // pred_fallthru
      _
    // Predicated region
    $region34: #{tpu_custom_call.1} parent=1 // pred_check
      _
    $region35: #{tpu_custom_call.1} parent=1 // pred_check_branch
      %88 = sbr.rel (0) target = $region37
    $region36: #{tpu_custom_call.1} parent=1 // pred_region
      %90 = dma.done [#allocation9], 512
    $region37: #{tpu_custom_call.1} parent=1 // pred_fallthru
      _
    // Predicated region
    $region38: #{tpu_custom_call.1} parent=1 // pred_check
      _
    $region39: #{tpu_custom_call.1} parent=1 // pred_check_branch
      %92 = sbr.rel (0) target = $region41
    $region40: #{tpu_custom_call.1} parent=1 // pred_region
      %94 = dma.done [#allocation9], 128
    $region41: #{tpu_custom_call.1} parent=1 // pred_fallthru
      _
    %v95 = vld [vmem:[#allocation5] sm:$0xff]
    %v96 = vld [vmem:[#allocation7] sm:$0xff]
    %v97 = vld [vmem:[#allocation7 + $0x8] sm:$0xff]
    %v98 = vld [vmem:[#allocation8] sm:$0xff]
    %v99 = vld [vmem:[#allocation8 + $0x8] sm:$0xff]
    %v100 = vld [vmem:[#allocation8 + $0x10] sm:$0x1]
    %v101 = vld [vmem:[#allocation8 + $0x18] sm:$0x1]
    %v102 = vld [vmem:[#allocation2] sm:$0xff]
    %v103 = vld [vmem:[#allocation2 + $0x8] sm:$0xff]
    %105 = vset.pattern.permute.xlu0 4
    %106 = vperm.xlu0 %105, %v95
    %v107 = vpop.permute.xlu0 %106
    %v109 = vmul.f32 %v102, %v107
    %v110 = vmul.f32 %v103, %v107
    %111 = vrot.lane.b32.xlu0 %v102, 17
    %v112 = vpop.permute.xlu0 %111
    %113 = vrot.lane.b32.xlu0 %v103, 17
    %v114 = vpop.permute.xlu0 %113
    %v115 = vlaneseq
    %v116 = vand.u32 %v115, 127
    %vm117 = vcmp.lt.s32.totalorder %v116, 17
    %v118 = vsel %vm117, %v112, %v114
    %v119 = vsel %vm117, %v114, %v112
    %120 = vset.pattern.permute.xlu0 0
    %121 = vperm.xlu0 %120, %v95
    %v122 = vpop.permute.xlu0 %121
    %v124 = vmul.f32 %v119, %v122
    %v125 = vmul.f32 %v118, %v122
    %v126 = vperm.slane %v98, 0
    %v127 = vperm.slane %v99, 0
    %v128 = vmul.f32 %v124, %v126
    %v129 = vmul.f32 %v125, %v127
    %v130 = vadd.f32 %v109, %v128
    %v131 = vadd.f32 %v110, %v129
    %132 = vrot.lane.b32.xlu0 %v102, 16
    %v133 = vpop.permute.xlu0 %132
    %134 = vrot.lane.b32.xlu0 %v103, 16
    %v135 = vpop.permute.xlu0 %134
    %vm136 = vcmp.lt.s32.totalorder %v116, 16
    %v137 = vsel %vm136, %v133, %v135
    %v138 = vsel %vm136, %v135, %v133
    %139 = vset.pattern.permute.xlu0 1
    %140 = vperm.xlu0 %139, %v95
    %v141 = vpop.permute.xlu0 %140
    %v143 = vmul.f32 %v138, %v141
    %v144 = vmul.f32 %v137, %v141
    %v145 = vperm.slane %v98, 1
    %v146 = vperm.slane %v99, 1
    %v147 = vmul.f32 %v143, %v145
    %v148 = vmul.f32 %v144, %v146
    %v149 = vadd.f32 %v130, %v147
    %v150 = vadd.f32 %v131, %v148
    %151 = vrot.lane.b32.xlu0 %v102, 15
    %v152 = vpop.permute.xlu0 %151
    %153 = vrot.lane.b32.xlu0 %v103, 15
    %v154 = vpop.permute.xlu0 %153
    %vm155 = vcmp.lt.s32.totalorder %v116, 15
    %v156 = vsel %vm155, %v152, %v154
    %v157 = vsel %vm155, %v154, %v152
    %158 = vset.pattern.permute.xlu0 2
    %159 = vperm.xlu0 %158, %v95
    %v160 = vpop.permute.xlu0 %159
    %v162 = vmul.f32 %v157, %v160
    %v163 = vmul.f32 %v156, %v160
    %v164 = vperm.slane %v98, 2
    %v165 = vperm.slane %v99, 2
    %v166 = vmul.f32 %v162, %v164
    %v167 = vmul.f32 %v163, %v165
    %v168 = vadd.f32 %v149, %v166
    %v169 = vadd.f32 %v150, %v167
    %170 = vrot.lane.b32.xlu0 %v102, 1
    %v171 = vpop.permute.xlu0 %170
    %172 = vrot.lane.b32.xlu0 %v103, 1
    %v173 = vpop.permute.xlu0 %172
    %vm174 = vcmp.lt.s32.totalorder %v116, 1
    %v175 = vsel %vm174, %v171, %v173
    %v176 = vsel %vm174, %v173, %v171
    %177 = vset.pattern.permute.xlu0 3
    %178 = vperm.xlu0 %177, %v95
    %v179 = vpop.permute.xlu0 %178
    %v181 = vmul.f32 %v176, %v179
    %v182 = vmul.f32 %v175, %v179
    %v183 = vperm.slane %v98, 3
    %v184 = vperm.slane %v99, 3
    %v185 = vmul.f32 %v181, %v183
    %v186 = vmul.f32 %v182, %v184
    %v187 = vadd.f32 %v168, %v185
    %v188 = vadd.f32 %v169, %v186
    %189 = vrot.lane.b32.xlu0 %v102, 127
    %v190 = vpop.permute.xlu0 %189
    %191 = vrot.lane.b32.xlu0 %v103, 127
    %v192 = vpop.permute.xlu0 %191
    %vm193 = vcmp.lt.s32.totalorder %v116, 127
    %v194 = vsel %vm193, %v190, %v192
    %v195 = vsel %vm193, %v192, %v190
    %196 = vset.pattern.permute.xlu0 5
    %197 = vperm.xlu0 %196, %v95
    %v198 = vpop.permute.xlu0 %197
    %v200 = vmul.f32 %v194, %v198
    %v201 = vmul.f32 %v195, %v198
    %v202 = vperm.slane %v98, 5
    %v203 = vperm.slane %v99, 5
    %v204 = vmul.f32 %v200, %v202
    %v205 = vmul.f32 %v201, %v203
    %v206 = vadd.f32 %v187, %v204
    %v207 = vadd.f32 %v188, %v205
    %208 = vrot.lane.b32.xlu0 %v102, 113
    %v209 = vpop.permute.xlu0 %208
    %210 = vrot.lane.b32.xlu0 %v103, 113
    %v211 = vpop.permute.xlu0 %210
    %vm212 = vcmp.lt.s32.totalorder %v116, 113
    %v213 = vsel %vm212, %v209, %v211
    %v214 = vsel %vm212, %v211, %v209
    %215 = vset.pattern.permute.xlu0 6
    %216 = vperm.xlu0 %215, %v95
    %v217 = vpop.permute.xlu0 %216
    %v219 = vmul.f32 %v213, %v217
    %v220 = vmul.f32 %v214, %v217
    %v221 = vperm.slane %v98, 6
    %v222 = vperm.slane %v99, 6
    %v223 = vmul.f32 %v219, %v221
    %v224 = vmul.f32 %v220, %v222
    %v225 = vadd.f32 %v206, %v223
    %v226 = vadd.f32 %v207, %v224
    %227 = vrot.lane.b32.xlu0 %v102, 112
    %v228 = vpop.permute.xlu0 %227
    %229 = vrot.lane.b32.xlu0 %v103, 112
    %v230 = vpop.permute.xlu0 %229
    %vm231 = vcmp.lt.s32.totalorder %v116, 112
    %v232 = vsel %vm231, %v228, %v230
    %v233 = vsel %vm231, %v230, %v228
    %234 = vset.pattern.permute.xlu0 7
    %235 = vperm.xlu0 %234, %v95
    %v236 = vpop.permute.xlu0 %235
    %v238 = vmul.f32 %v232, %v236
    %v239 = vmul.f32 %v233, %v236
    %v240 = vperm.slane %v98, 7
    %v241 = vperm.slane %v99, 7
    %v242 = vmul.f32 %v238, %v240
    %v243 = vmul.f32 %v239, %v241
    %v244 = vadd.f32 %v225, %v242
    %v245 = vadd.f32 %v226, %v243
    %246 = vrot.lane.b32.xlu0 %v102, 111
    %v247 = vpop.permute.xlu0 %246
    %248 = vrot.lane.b32.xlu0 %v103, 111
    %v249 = vpop.permute.xlu0 %248
    %vm250 = vcmp.lt.s32.totalorder %v116, 111
    %v251 = vsel %vm250, %v247, %v249
    %v252 = vsel %vm250, %v249, %v247
    %253 = vset.pattern.permute.xlu0 8
    %254 = vperm.xlu0 %253, %v95
    %v255 = vpop.permute.xlu0 %254
    %v257 = vmul.f32 %v251, %v255
    %v258 = vmul.f32 %v252, %v255
    %v259 = vperm.slane %v100, 0
    %v260 = vperm.slane %v101, 0
    %v261 = vmul.f32 %v257, %v259
    %v262 = vmul.f32 %v258, %v260
    %v263 = vadd.f32 %v244, %v261
    %v264 = vadd.f32 %v245, %v262
    %265 = vset.pattern.permute.xlu0 9
    %266 = vperm.xlu0 %265, %v95
    %v267 = vpop.permute.xlu0 %266
    %v269 = vadd.f32 %v263, %v267
    %v270 = vadd.f32 %v264, %v267
    %v271 = vadd.f32 %v269, %v270
    %272 = vadd.xlane.f32.xlu0 %v271
    %v273 = vpop.xlane.xlu0 %272
    %v274 = vmul.f32 %v269, %v269
    %v275 = vmul.f32 %v270, %v270
    %v276 = vadd.f32 %v274, %v275
    %277 = vadd.xlane.f32.xlu0 %v276
    %v278 = vpop.xlane.xlu0 %277
    %s279 = scalar_lea.vmem [#allocation2], 16
    %v280 = vld [vmem:[%s279] sm:$0xff]
    %v281 = vld [vmem:[%s279 + $0x8] sm:$0xff]
    %v282 = vmul.f32 %v280, %v107
    %v283 = vmul.f32 %v281, %v107
    %284 = vrot.lane.b32.xlu0 %v280, 17
    %v285 = vpop.permute.xlu0 %284
    %286 = vrot.lane.b32.xlu0 %v281, 17
    %v287 = vpop.permute.xlu0 %286
    %v288 = vsel %vm117, %v285, %v287
    %v289 = vsel %vm117, %v287, %v285
    %v290 = vmul.f32 %v289, %v122
    %v291 = vmul.f32 %v288, %v122
    %v292 = vmul.f32 %v290, %v126
    %v293 = vmul.f32 %v291, %v127
    %v294 = vadd.f32 %v282, %v292
    %v295 = vadd.f32 %v283, %v293
    %296 = vrot.lane.b32.xlu0 %v280, 16
    %v297 = vpop.permute.xlu0 %296
    %298 = vrot.lane.b32.xlu0 %v281, 16
    %v299 = vpop.permute.xlu0 %298
    %v300 = vsel %vm136, %v297, %v299
    %v301 = vsel %vm136, %v299, %v297
    %v302 = vmul.f32 %v301, %v141
    %v303 = vmul.f32 %v300, %v141
    %v304 = vmul.f32 %v302, %v145
    %v305 = vmul.f32 %v303, %v146
    %v306 = vadd.f32 %v294, %v304
    %v307 = vadd.f32 %v295, %v305
    %308 = vrot.lane.b32.xlu0 %v280, 15
    %v309 = vpop.permute.xlu0 %308
    %310 = vrot.lane.b32.xlu0 %v281, 15
    %v311 = vpop.permute.xlu0 %310
    %v312 = vsel %vm155, %v309, %v311
    %v313 = vsel %vm155, %v311, %v309
    %v314 = vmul.f32 %v313, %v160
    %v315 = vmul.f32 %v312, %v160
    %v316 = vmul.f32 %v314, %v164
    %v317 = vmul.f32 %v315, %v165
    %v318 = vadd.f32 %v306, %v316
    %v319 = vadd.f32 %v307, %v317
    %320 = vrot.lane.b32.xlu0 %v280, 1
    %v321 = vpop.permute.xlu0 %320
    %322 = vrot.lane.b32.xlu0 %v281, 1
    %v323 = vpop.permute.xlu0 %322
    %v324 = vsel %vm174, %v321, %v323
    %v325 = vsel %vm174, %v323, %v321
    %v326 = vmul.f32 %v325, %v179
    %v327 = vmul.f32 %v324, %v179
    %v328 = vmul.f32 %v326, %v183
    %v329 = vmul.f32 %v327, %v184
    %v330 = vadd.f32 %v318, %v328
    %v331 = vadd.f32 %v319, %v329
    %332 = vrot.lane.b32.xlu0 %v280, 127
    %v333 = vpop.permute.xlu0 %332
    %334 = vrot.lane.b32.xlu0 %v281, 127
    %v335 = vpop.permute.xlu0 %334
    %v336 = vsel %vm193, %v333, %v335
    %v337 = vsel %vm193, %v335, %v333
    %v338 = vmul.f32 %v336, %v198
    %v339 = vmul.f32 %v337, %v198
    %v340 = vmul.f32 %v338, %v202
    %v341 = vmul.f32 %v339, %v203
    %v342 = vadd.f32 %v330, %v340
    %v343 = vadd.f32 %v331, %v341
    %344 = vrot.lane.b32.xlu0 %v280, 113
    %v345 = vpop.permute.xlu0 %344
    %346 = vrot.lane.b32.xlu0 %v281, 113
    %v347 = vpop.permute.xlu0 %346
    %v348 = vsel %vm212, %v345, %v347
    %v349 = vsel %vm212, %v347, %v345
    %v350 = vmul.f32 %v348, %v217
    %v351 = vmul.f32 %v349, %v217
    %v352 = vmul.f32 %v350, %v221
    %v353 = vmul.f32 %v351, %v222
    %v354 = vadd.f32 %v342, %v352
    %v355 = vadd.f32 %v343, %v353
    %356 = vrot.lane.b32.xlu0 %v280, 112
    %v357 = vpop.permute.xlu0 %356
    %358 = vrot.lane.b32.xlu0 %v281, 112
    %v359 = vpop.permute.xlu0 %358
    %v360 = vsel %vm231, %v357, %v359
    %v361 = vsel %vm231, %v359, %v357
    %v362 = vmul.f32 %v360, %v236
    %v363 = vmul.f32 %v361, %v236
    %v364 = vmul.f32 %v362, %v240
    %v365 = vmul.f32 %v363, %v241
    %v366 = vadd.f32 %v354, %v364
    %v367 = vadd.f32 %v355, %v365
    %368 = vrot.lane.b32.xlu0 %v280, 111
    %v369 = vpop.permute.xlu0 %368
    %370 = vrot.lane.b32.xlu0 %v281, 111
    %v371 = vpop.permute.xlu0 %370
    %v372 = vsel %vm250, %v369, %v371
    %v373 = vsel %vm250, %v371, %v369
    %v374 = vmul.f32 %v372, %v255
    %v375 = vmul.f32 %v373, %v255
    %v376 = vmul.f32 %v374, %v259
    %v377 = vmul.f32 %v375, %v260
    %v378 = vadd.f32 %v366, %v376
    %v379 = vadd.f32 %v367, %v377
    %v380 = vadd.f32 %v378, %v267
    %v381 = vadd.f32 %v379, %v267
    %v382 = vadd.f32 %v380, %v381
    %383 = vadd.xlane.f32.xlu0 %v382
    %v384 = vpop.xlane.xlu0 %383
    %v385 = vmul.f32 %v380, %v380
    %v386 = vmul.f32 %v381, %v381
    %v387 = vadd.f32 %v385, %v386
    %388 = vadd.xlane.f32.xlu0 %v387
    %v389 = vpop.xlane.xlu0 %388
    %vm390 = vcmask 7168
    %v391 = vsel %vm390, %v273, %v278
    %vm392 = vcmask 15360
    %v393 = vsel %vm392, %v391, %v384
    %vm394 = vcmask 23552
    %v395 = vsel %vm394, %v393, %v389
    %v396 = vld [vmem:[#allocation10] sm:$0xff]
    %vm397 = vcmask 64512
    %v399 = vsel %vm397, %v396, 0
    %401 = vmatpush.msra.mxu0 0.0
    %402 = vmatpush.msra.mxu0 0.0
    %403 = vmatpush.msra.mxu0 0.0
    %404 = vmatpush.msra.mxu0 0.0
    %405 = vmatpush.msra.mxu0 0.0
    %406 = vmatpush.msra.mxu0 0.0
    %407 = vmatpush.msra.mxu0 0.0
    %408 = vmatpush.msra.mxu0 0.0
    %409 = vmatpush.msra.mxu0 0.0
    %410 = vmatpush.msra.mxu0 0.0
    %411 = vmatpush.msra.mxu0 0.0
    %412 = vmatpush.msra.mxu0 0.0
    %413 = vmatpush.msra.mxu0 0.0
    %414 = vmatpush.msra.mxu0 0.0
    %415 = vmatpush.msra.mxu0 0.0
    %416 = vmatpush.msra.mxu0 %v395
    %417 = vmatmul.f32.gmra.mxu0 %v399
    %v418 = vpop.f32.mrf.mxu0
    %v419 = vadd.f32 0.0, %v418
    %420 = vdwg.mxu0
    %v421 = vrcp.pop 512.0
    %v422 = vmul.f32 512.0, %v421
    %v423 = vsub.f32 1.0, %v422
    %v424 = vmul.f32 %v421, %v423
    %v425 = vadd.f32 %v421, %v424
    %vm426 = vweird.f32 %v421
    %v427 = vsel %vm426, %v421, %v425
    %v428 = vmul.f32 %v419, %v427
    %v429 = vmul.f32 %v428, %v428
    %431 = vrot.lane.b32.xlu0 %v429, 1
    %v432 = vpop.permute.xlu0 %431
    %v434 = vsub.f32 %v428, %v432
    %v435 = vadd.f32 %v434, 1e-05
    %v436 = vrsqrt.pop %v435
    %v437 = vmul.f32 %v436, %v435
    %v438 = vmul.f32 %v437, %v436
    %v439 = vmul.f32 0.5, %v438
    %v440 = vsub.f32 1.5, %v439
    %v441 = vmul.f32 %v436, %v440
    %vm442 = vweird.f32 %v435
    %vm443 = vweird.f32 %v436
    %vm444 = vmor %vm442, %vm443
    %v445 = vsel %vm444, %v436, %v441
    %447 = vset.pattern.permute.xlu0 0
    %448 = vperm.xlu0 %447, %v428
    %v449 = vpop.permute.xlu0 %448
    %v451 = vsub.f32 %v269, %v449
    %v452 = vsub.f32 %v270, %v449
    %454 = vset.pattern.permute.xlu0 1
    %455 = vperm.xlu0 %454, %v445
    %v456 = vpop.permute.xlu0 %455
    %v458 = vmul.f32 %v451, %v456
    %v459 = vmul.f32 %v452, %v456
    %461 = vset.pattern.permute.xlu0 8
    %462 = vperm.xlu0 %461, %v96
    %v463 = vpop.permute.xlu0 %462
    %466 = vset.pattern.permute.xlu0 8
    %467 = vperm.xlu0 %466, %v97
    %v468 = vpop.permute.xlu0 %467
    %v470 = vsel %vm397, %v96, 0
    %v472 = vsel %vm397, %v97, 0
    %474 = vmatpush.msra.mxu0 0.0
    %475 = vmatpush.msra.mxu0 0.0
    %476 = vmatpush.msra.mxu0 0.0
    %477 = vmatpush.msra.mxu0 0.0
    %478 = vmatpush.msra.mxu0 0.0
    %479 = vmatpush.msra.mxu0 0.0
    %480 = vmatpush.msra.mxu0 0.0
    %481 = vmatpush.msra.mxu0 0.0
    %482 = vmatpush.msra.mxu0 0.0
    %483 = vmatpush.msra.mxu0 0.0
    %484 = vmatpush.msra.mxu0 0.0
    %485 = vmatpush.msra.mxu0 0.0
    %486 = vmatpush.msra.mxu0 0.0
    %487 = vmatpush.msra.mxu0 0.0
    %488 = vmatpush.msra.mxu0 0.0
    %489 = vmatpush.msra.mxu0 %v458
    %490 = vmatmul.f32.gmra.mxu0 %v470
    %v491 = vpop.f32.mrf.mxu0
    %v492 = vadd.f32 %v463, %v491
    %493 = vmatmul.f32.gmra.mxu0 %v472
    %v494 = vpop.f32.mrf.mxu0
    %v495 = vadd.f32 %v468, %v494
    %496 = vdwg.mxu0
    %497 = vmatpush.msra.mxu0 0.0
    %498 = vmatpush.msra.mxu0 0.0
    %499 = vmatpush.msra.mxu0 0.0
    %500 = vmatpush.msra.mxu0 0.0
    %501 = vmatpush.msra.mxu0 0.0
    %502 = vmatpush.msra.mxu0 0.0
    %503 = vmatpush.msra.mxu0 0.0
    %504 = vmatpush.msra.mxu0 0.0
    %505 = vmatpush.msra.mxu0 0.0
    %506 = vmatpush.msra.mxu0 0.0
    %507 = vmatpush.msra.mxu0 0.0
    %508 = vmatpush.msra.mxu0 0.0
    %509 = vmatpush.msra.mxu0 0.0
    %510 = vmatpush.msra.mxu0 0.0
    %511 = vmatpush.msra.mxu0 0.0
    %512 = vmatpush.msra.mxu0 %v459
    %513 = vmatmul.f32.gmra.mxu0 %v470
    %v514 = vpop.f32.mrf.mxu0
    %v515 = vadd.f32 %v463, %v514
    %516 = vmatmul.f32.gmra.mxu0 %v472
    %v517 = vpop.f32.mrf.mxu0
    %v518 = vadd.f32 %v468, %v517
    %519 = vdwg.mxu0
    %520 = vst [vmem:[#allocation11] sm:$0xff] %v492
    %521 = vst [vmem:[#allocation11 + $0x8] sm:$0xff] %v515
    %522 = vst [vmem:[#allocation11 + $0x10] sm:$0xff] %v495
    %523 = vst [vmem:[#allocation11 + $0x18] sm:$0xff] %v518
    %524 = vset.pattern.permute.xlu0 2
    %525 = vperm.xlu0 %524, %v428
    %v526 = vpop.permute.xlu0 %525
    %v528 = vsub.f32 %v380, %v526
    %v529 = vsub.f32 %v381, %v526
    %530 = vset.pattern.permute.xlu0 3
    %531 = vperm.xlu0 %530, %v445
    %v532 = vpop.permute.xlu0 %531
    %v534 = vmul.f32 %v528, %v532
    %v535 = vmul.f32 %v529, %v532
    %536 = vmatpush.msra.mxu0 0.0
    %537 = vmatpush.msra.mxu0 0.0
    %538 = vmatpush.msra.mxu0 0.0
    %539 = vmatpush.msra.mxu0 0.0
    %540 = vmatpush.msra.mxu0 0.0
    %541 = vmatpush.msra.mxu0 0.0
    %542 = vmatpush.msra.mxu0 0.0
    %543 = vmatpush.msra.mxu0 0.0
    %544 = vmatpush.msra.mxu0 0.0
    %545 = vmatpush.msra.mxu0 0.0
    %546 = vmatpush.msra.mxu0 0.0
    %547 = vmatpush.msra.mxu0 0.0
    %548 = vmatpush.msra.mxu0 0.0
    %549 = vmatpush.msra.mxu0 0.0
    %550 = vmatpush.msra.mxu0 0.0
    %551 = vmatpush.msra.mxu0 %v534
    %552 = vmatmul.f32.gmra.mxu0 %v470
    %v553 = vpop.f32.mrf.mxu0
    %v554 = vadd.f32 %v463, %v553
    %555 = vmatmul.f32.gmra.mxu0 %v472
    %v556 = vpop.f32.mrf.mxu0
    %v557 = vadd.f32 %v468, %v556
    %558 = vdwg.mxu0
    %559 = vmatpush.msra.mxu0 0.0
    %560 = vmatpush.msra.mxu0 0.0
    %561 = vmatpush.msra.mxu0 0.0
    %562 = vmatpush.msra.mxu0 0.0
    %563 = vmatpush.msra.mxu0 0.0
    %564 = vmatpush.msra.mxu0 0.0
    %565 = vmatpush.msra.mxu0 0.0
    %566 = vmatpush.msra.mxu0 0.0
    %567 = vmatpush.msra.mxu0 0.0
    %568 = vmatpush.msra.mxu0 0.0
    %569 = vmatpush.msra.mxu0 0.0
    %570 = vmatpush.msra.mxu0 0.0
    %571 = vmatpush.msra.mxu0 0.0
    %572 = vmatpush.msra.mxu0 0.0
    %573 = vmatpush.msra.mxu0 0.0
    %574 = vmatpush.msra.mxu0 %v535
    %575 = vmatmul.f32.gmra.mxu0 %v470
    %v576 = vpop.f32.mrf.mxu0
    %v577 = vadd.f32 %v463, %v576
    %578 = vmatmul.f32.gmra.mxu0 %v472
    %v579 = vpop.f32.mrf.mxu0
    %v580 = vadd.f32 %v468, %v579
    %581 = vdwg.mxu0
    %s582 = scalar_lea.vmem [#allocation11], 32
    %583 = vst [vmem:[%s582] sm:$0xff] %v554
    %584 = vst [vmem:[%s582 + $0x8] sm:$0xff] %v577
    %585 = vst [vmem:[%s582 + $0x10] sm:$0xff] %v557
    %586 = vst [vmem:[%s582 + $0x18] sm:$0xff] %v580
    // Predicated region
    $region42: #{tpu_custom_call.1} parent=1 // pred_check
      _
    $region43: #{tpu_custom_call.1} parent=1 // pred_check_branch
      %588 = sbr.rel (0) target = $region45
    $region44: #{tpu_custom_call.1} parent=1 // pred_region
      %590 = vsyncadd [#allocation4], 0
      %s591 = sshll.u32 [#allocation11], 4
      %s592 = int_to_ptr.vmem [resolvable:$true] %s591
      %s593 = sshll.u32 %s5, 4
      %s594 = int_to_ptr.hbm [resolvable:$true] %s593
      %599 = dma.vmem_to_hbm [thread:$0]  %s592, 1024, %s594, [#allocation4], 256, 256, 16
    $region45: #{tpu_custom_call.1} parent=1 // pred_fallthru
      _
    // Predicated region
    $region46: #{tpu_custom_call.1} parent=1 // pred_check
      _
    $region47: #{tpu_custom_call.1} parent=1 // pred_check_branch
      %601 = sbr.rel (0) target = $region49
    $region48: #{tpu_custom_call.1} parent=1 // pred_region
      %603 = dma.done [#allocation4], 1024
    $region49: #{tpu_custom_call.1} parent=1 // pred_fallthru
      _
    %604 = vsyncpa [#allocation3], 1
    %605 = vsyncpa [#allocation6], 1
    %606 = vsyncpa [#allocation9], 1
    %607 = vsyncpa [#allocation4], 1

</llo_original>
